<compile_context>
chip_gen: v5e
topology: v5e:2x2
jax: 0.10.0
libtpu: 0.0.40
codegen_flags: <defaults>
</compile_context>

<pallas_src>
import functools

import jax
import jax.numpy as jnp
import numpy as np
from jax.experimental import pallas as pl
from jax.experimental.pallas import tpu as pltpu


def _cse_kernel(x_ref, w1t_ref, b1_ref, w2t_ref, b2_ref, o_ref, *, inv_hw):
    # x_ref  : (NB, C, HW)  block of batch elements; C on sublanes, HW on lanes
    # w1t_ref: (C, Ch)      linear_1 weight, pre-transposed (in_features x out_features)
    # b1_ref : (1, Ch)
    # w2t_ref: (Ch, C)      linear_2 weight, pre-transposed
    # b2_ref : (1, C)
    # o_ref  : (NB, C, HW)
    x = x_ref[...]                                                  # native dtype

    # Squeeze: global average pool over the spatial (lane) axis, f32 accumulate.
    s = jnp.sum(x, axis=2, dtype=jnp.float32) * inv_hw              # (NB, C), lane-dense

    # Excitation MLP: two small batched matmuls on the MXU (f32 accumulate).
    h = jnp.dot(s, w1t_ref[...], preferred_element_type=jnp.float32) + b1_ref[...]
    h = jnp.maximum(h, 0.0)                                         # ReLU, (NB, Ch)
    g = jnp.dot(h, w2t_ref[...], preferred_element_type=jnp.float32) + b2_ref[...]
    g = jax.nn.sigmoid(g)                                           # (NB, C)

    # Re-scale: per-(batch, channel) gate broadcast across the spatial lanes.
    # Only the tiny (NB, C) gate gets re-laid-out to (NB, C, 1); x stays put.
    gate = g.astype(x.dtype)[:, :, None]                            # (NB, C, 1)
    o_ref[...] = (x * gate).astype(o_ref.dtype)


def _pick_batch_block(N, C, HW, itemsize):
    """Per-step batch block size.

    Target ~2 MB x tiles per step (double-buffered in+out = ~8 MB, inside v5e's
    16 MiB scoped-VMEM default and far under v6e/v7x budgets), while preferring
    >=2 grid steps when N is large enough that each step still moves >=256 KB
    (so v7x megacore has something to split)."""
    per_elem = C * HW * itemsize
    cap = max(1, (2 << 20) // per_elem)
    nb = min(N, cap)
    # Avoid partial last blocks: shrink to a divisor of N.
    while nb > 1 and N % nb != 0:
        nb -= 1
    # If everything fits in one step but N can be split into two still-large
    # steps, do so (keeps both v7x TensorCores busy).
    if N // nb == 1 and N > 1 and N % 2 == 0 and (N // 2) * per_elem >= (256 << 10):
        nb = N // 2
    return nb


def cse_forward(x_nchw, w1, b1, w2, b2):
    """Forward of CSE for a (N, C, H, W) input (PyTorch nn.Linear weight layout)."""
    N, C, H, W = x_nchw.shape
    Ch = w1.shape[0]
    assert w1.shape == (Ch, C) and w2.shape == (C, Ch)
    assert C % 8 == 0 and (H * W) % 128 == 0, "use sublane/lane-aligned small shapes"
    HW = H * W
    itemsize = jnp.dtype(x_nchw.dtype).itemsize

    # Free layout plumbing in the wrapper (no transposes of x: spatial is already
    # last).  Weights are pre-transposed so the kernel runs s @ W^T directly.
    x_flat = x_nchw.reshape(N, C, HW)
    w1t = jnp.asarray(w1, jnp.float32).T          # (C, Ch)
    w2t = jnp.asarray(w2, jnp.float32).T          # (Ch, C)
    b1c = jnp.asarray(b1, jnp.float32).reshape(1, Ch)
    b2c = jnp.asarray(b2, jnp.float32).reshape(1, C)

    NB = _pick_batch_block(N, C, HW, itemsize)
    grid = (pl.cdiv(N, NB),)

    kernel = functools.partial(_cse_kernel, inv_hw=1.0 / HW)

    cost = pl.CostEstimate(
        flops=2 * N * C * Ch * 2 + 2 * N * C * HW,      # two matmuls + pool + rescale
        transcendentals=N * C,                           # sigmoid
        bytes_accessed=2 * N * C * HW * itemsize
        + (C * Ch * 2 + C + Ch) * 4,
    )

    out_flat = pl.pallas_call(
        kernel,
        out_shape=jax.ShapeDtypeStruct((N, C, HW), x_nchw.dtype),
        grid=grid,
        in_specs=[
            pl.BlockSpec((NB, C, HW), lambda n: (n, 0, 0)),
            pl.BlockSpec((C, Ch), lambda n: (0, 0)),
            pl.BlockSpec((1, Ch), lambda n: (0, 0)),
            pl.BlockSpec((Ch, C), lambda n: (0, 0)),
            pl.BlockSpec((1, C), lambda n: (0, 0)),
        ],
        out_specs=pl.BlockSpec((NB, C, HW), lambda n: (n, 0, 0)),
        compiler_params=pltpu.CompilerParams(
            dimension_semantics=("parallel",)),
        cost_estimate=cost,
        # If the caller donates x, input_output_aliases={0: 0} would also save
        # the second N*C*HW HBM buffer (footprint only, not bandwidth).
    )(x_flat, w1t, b1c, w2t, b2c)

    return out_flat.reshape(N, C, H, W)


def _reference(x, w1, b1, w2, b2):
    """Pure-JAX mirror of the PyTorch CSE.forward (for correctness checking)."""
    N, C, H, W = x.shape
    s = x.reshape(N, C, -1).mean(-1)                       # (N, C)
    h = jnp.maximum(s @ w1.T + b1, 0.0)                    # (N, Ch)
    g = jax.nn.sigmoid(h @ w2.T + b2)                      # (N, C)
    return x * g[:, :, None, None]


if __name__ == "__main__":
    # Small shapes consistent with CSE(in_ch=32, r=4) on a (2, 32, 16, 16) input.
    N, C, H, W = 2, 32, 16, 16
    r = 4
    Ch = C // r

    key = jax.random.PRNGKey(0)
    kx, kw1, kb1, kw2, kb2 = jax.random.split(key, 5)

    x = jax.random.normal(kx, (N, C, H, W), dtype=jnp.float32)
    # nn.Linear default init: U(-1/sqrt(fan_in), 1/sqrt(fan_in)).
    lim1 = 1.0 / np.sqrt(C)
    lim2 = 1.0 / np.sqrt(Ch)
    w1 = jax.random.uniform(kw1, (Ch, C), minval=-lim1, maxval=lim1, dtype=jnp.float32)
    b1 = jax.random.uniform(kb1, (Ch,), minval=-lim1, maxval=lim1, dtype=jnp.float32)
    w2 = jax.random.uniform(kw2, (C, Ch), minval=-lim2, maxval=lim2, dtype=jnp.float32)
    b2 = jax.random.uniform(kb2, (C,), minval=-lim2, maxval=lim2, dtype=jnp.float32)

    out = cse_forward(x, w1, b1, w2, b2)
    out = jax.block_until_ready(out)

    ref = _reference(x, w1, b1, w2, b2)
    np.testing.assert_allclose(np.asarray(out), np.asarray(ref), rtol=1e-5, atol=1e-5)

    print("KERNEL_OK")
</pallas_src>

<mosaic_0001>
module attributes {stable_mosaic.version = 11 : i64} {
  func.func @_cse_kernel(%arg0: i32, %arg1: memref<2x32x256xf32, #tpu.memory_space<vmem>>, %arg2: memref<32x8xf32, #tpu.memory_space<vmem>>, %arg3: memref<1x8xf32, #tpu.memory_space<vmem>>, %arg4: memref<8x32xf32, #tpu.memory_space<vmem>>, %arg5: memref<1x32xf32, #tpu.memory_space<vmem>>, %arg6: memref<2x32x256xf32, #tpu.memory_space<vmem>>) attributes {dimension_semantics = [#tpu.dimension_semantics<parallel>], iteration_bounds = array<i64: 1>, scalar_prefetch = 0 : i64, scratch_operands = 0 : i64, tpu.core_type = #tpu.core_type<tc>, window_params = [{transform_indices = @transform_0, window_bounds = array<i64: 2, 32, 256>}, {pipeline_mode = #tpu.pipeline_mode<synchronous>, transform_indices = @transform_1, window_bounds = array<i64: 32, 8>}, {pipeline_mode = #tpu.pipeline_mode<synchronous>, transform_indices = @transform_2, window_bounds = array<i64: 1, 8>}, {pipeline_mode = #tpu.pipeline_mode<synchronous>, transform_indices = @transform_3, window_bounds = array<i64: 8, 32>}, {pipeline_mode = #tpu.pipeline_mode<synchronous>, transform_indices = @transform_4, window_bounds = array<i64: 1, 32>}, {transform_indices = @transform_5, window_bounds = array<i64: 2, 32, 256>}]} {
    %c0 = arith.constant 0 : index
    %c0_0 = arith.constant 0 : index
    %c0_1 = arith.constant 0 : index
    %0 = vector.load %arg1[%c0, %c0_0, %c0_1] : memref<2x32x256xf32, #tpu.memory_space<vmem>>, vector<2x32x256xf32>
    %cst = arith.constant dense<0.000000e+00> : vector<2x32xf32>
    %1 = vector.multi_reduction <add>, %0, %cst [2] : vector<2x32x256xf32> to vector<2x32xf32>
    %cst_2 = arith.constant 3.906250e-03 : f32
    %2 = vector.broadcast %cst_2 : f32 to vector<2x32xf32>
    %3 = arith.mulf %1, %2 : vector<2x32xf32>
    %c0_3 = arith.constant 0 : index
    %c0_4 = arith.constant 0 : index
    %4 = vector.load %arg2[%c0_3, %c0_4] : memref<32x8xf32, #tpu.memory_space<vmem>>, vector<32x8xf32>
    %cst_5 = arith.constant dense<0.000000e+00> : vector<2x8xf32>
    %5 = tpu.matmul %3, %4, %cst_5 {dimension_numbers = #tpu.dot_dimension_numbers<[1], [0], [0], [1], [0, 0, 1, 1], [], []>} : vector<2x32xf32>, vector<32x8xf32>, vector<2x8xf32> -> vector<2x8xf32>
    %c0_6 = arith.constant 0 : index
    %c0_7 = arith.constant 0 : index
    %6 = vector.load %arg3[%c0_6, %c0_7] : memref<1x8xf32, #tpu.memory_space<vmem>>, vector<1x8xf32>
    %7 = vector.broadcast %6 : vector<1x8xf32> to vector<2x8xf32>
    %8 = arith.addf %5, %7 : vector<2x8xf32>
    %cst_8 = arith.constant 0.000000e+00 : f32
    %9 = vector.broadcast %cst_8 : f32 to vector<2x8xf32>
    %10 = arith.maximumf %8, %9 : vector<2x8xf32>
    %c0_9 = arith.constant 0 : index
    %c0_10 = arith.constant 0 : index
    %11 = vector.load %arg4[%c0_9, %c0_10] : memref<8x32xf32, #tpu.memory_space<vmem>>, vector<8x32xf32>
    %cst_11 = arith.constant dense<0.000000e+00> : vector<2x32xf32>
    %12 = tpu.matmul %10, %11, %cst_11 {dimension_numbers = #tpu.dot_dimension_numbers<[1], [0], [0], [1], [0, 0, 1, 1], [], []>} : vector<2x8xf32>, vector<8x32xf32>, vector<2x32xf32> -> vector<2x32xf32>
    %c0_12 = arith.constant 0 : index
    %c0_13 = arith.constant 0 : index
    %13 = vector.load %arg5[%c0_12, %c0_13] : memref<1x32xf32, #tpu.memory_space<vmem>>, vector<1x32xf32>
    %14 = vector.broadcast %13 : vector<1x32xf32> to vector<2x32xf32>
    %15 = arith.addf %12, %14 : vector<2x32xf32>
    %16 = arith.negf %15 : vector<2x32xf32>
    %17 = math.exp %16 : vector<2x32xf32>
    %cst_14 = arith.constant 1.000000e+00 : f32
    %18 = vector.broadcast %cst_14 : f32 to vector<2x32xf32>
    %19 = arith.addf %18, %17 : vector<2x32xf32>
    %20 = arith.divf %18, %19 : vector<2x32xf32>
    %21 = vector.shape_cast %20 : vector<2x32xf32> to vector<2x32x1xf32>
    %22 = vector.broadcast %21 : vector<2x32x1xf32> to vector<2x32x256xf32>
    %23 = arith.mulf %0, %22 : vector<2x32x256xf32>
    %c0_15 = arith.constant 0 : index
    %c0_16 = arith.constant 0 : index
    %c0_17 = arith.constant 0 : index
    %24 = vector.load %arg6[%c0_15, %c0_16, %c0_17] : memref<2x32x256xf32, #tpu.memory_space<vmem>>, vector<2x32x256xf32>
    tpu.vector_store %arg6[%c0_15, %c0_16, %c0_17], %23 {strides = array<i32>} : memref<2x32x256xf32, #tpu.memory_space<vmem>>, vector<2x32x256xf32>,
    return
  }
  func.func @transform_0(%arg0: i32) -> (i32, i32, i32) {
    %c0_i32 = arith.constant 0 : i32
    %c0_i32_0 = arith.constant 0 : i32
    %c0_i32_1 = arith.constant 0 : i32
    return %arg0, %c0_i32, %c0_i32_0 : i32, i32, i32
  }
  func.func @transform_1(%arg0: i32) -> (i32, i32) {
    %c0_i32 = arith.constant 0 : i32
    %c0_i32_0 = arith.constant 0 : i32
    %c0_i32_1 = arith.constant 0 : i32
    return %c0_i32, %c0_i32_0 : i32, i32
  }
  func.func @transform_2(%arg0: i32) -> (i32, i32) {
    %c0_i32 = arith.constant 0 : i32
    %c0_i32_0 = arith.constant 0 : i32
    %c0_i32_1 = arith.constant 0 : i32
    return %c0_i32, %c0_i32_0 : i32, i32
  }
  func.func @transform_3(%arg0: i32) -> (i32, i32) {
    %c0_i32 = arith.constant 0 : i32
    %c0_i32_0 = arith.constant 0 : i32
    %c0_i32_1 = arith.constant 0 : i32
    return %c0_i32, %c0_i32_0 : i32, i32
  }
  func.func @transform_4(%arg0: i32) -> (i32, i32) {
    %c0_i32 = arith.constant 0 : i32
    %c0_i32_0 = arith.constant 0 : i32
    %c0_i32_1 = arith.constant 0 : i32
    return %c0_i32, %c0_i32_0 : i32, i32
  }
  func.func @transform_5(%arg0: i32) -> (i32, i32, i32) {
    %c0_i32 = arith.constant 0 : i32
    %c0_i32_0 = arith.constant 0 : i32
    %c0_i32_1 = arith.constant 0 : i32
    return %arg0, %c0_i32, %c0_i32_0 : i32, i32, i32
  }
}

</mosaic_0001>

<llo_original>
// kernel: tpu_custom_call.1
$region0: #{tpu_custom_call.1}
  #allocation0 [shape = 'u32[]', space=smem, size = 0x4, offset = 0x4, fixed_abs, tag = 'smem constant byte address 0x4 - core index']
  #allocation1 [shape = 'u32[72,128]{1,0:T(1,128)}', space=vmem, size = 0x9000, scoped, tag = 'internal scratch']
  %s0 = inlined_call_operand.hbm [shape: f32[2,32,256], index: 0, kind: input, shape index: {}]
  %s1 = inlined_call_operand.vmem [shape: f32[32,8], index: 1, kind: input, shape index: {}]
  %s2 = inlined_call_operand.vmem [shape: f32[1,8], index: 2, kind: input, shape index: {}]
  %s3 = inlined_call_operand.vmem [shape: f32[8,32], index: 3, kind: input, shape index: {}]
  %s4 = inlined_call_operand.vmem [shape: f32[1,32], index: 4, kind: input, shape index: {}]
  %s5 = inlined_call_operand.hbm [shape: f32[2,32,256], index: 5, kind: output, shape index: {}]
  %s6 = sld [smem:[#allocation0]]
  $region34: #{tpu_custom_call.1} parent=0
    _
  %s8 = ssub.s32 1, %s6
  %s9 = scalar_select 0, %s8, %s6
  $region1: #{tpu_custom_call.1} parent=0
    #allocation2 [shape = 'u8[65536]{0}', space=vmem, size = 0x10000, scoped, tag = 'input window, operand 0, single buffered']
    #allocation3 [shape = 's32[1]{0}', space=sflag, size = 0x4, scoped, tag = 'scoped memory for tpu_custom_call.1']
    #allocation4 [shape = 's32[1]{0}', space=sflag, size = 0x4, scoped, tag = 'scoped memory for tpu_custom_call.1']
    #allocation5 [shape = 'u8[65536]{0}', space=vmem, size = 0x10000, scoped, tag = 'output window, operand 0, single buffered']
    %10 = vsyncpa [#allocation3], 0
    %11 = vsyncpa [#allocation4], 0
    // Predicated region
    $region2: #{tpu_custom_call.1} parent=1 // pred_check
      _
    $region3: #{tpu_custom_call.1} parent=1 // pred_check_branch
      %13 = sbr.rel (0) target = $region5
    $region4: #{tpu_custom_call.1} parent=1 // pred_region
      %15 = vsyncadd [#allocation3], 0
      %s16 = sshll.u32 %s0, 4
      %s17 = int_to_ptr.hbm [resolvable:$true] %s16
      %s18 = sshll.u32 [#allocation2], 4
      %s19 = int_to_ptr.vmem [resolvable:$true] %s18
      %24 = dma.hbm_to_vmem [thread:$0]  %s17, 2048, %s19, [#allocation3], 256, 256, 16
    $region5: #{tpu_custom_call.1} parent=1 // pred_fallthru
      _
    // Predicated region
    $region6: #{tpu_custom_call.1} parent=1 // pred_check
      _
    $region7: #{tpu_custom_call.1} parent=1 // pred_check_branch
      %26 = sbr.rel (0) target = $region9
    $region8: #{tpu_custom_call.1} parent=1 // pred_region
      _
    $region9: #{tpu_custom_call.1} parent=1 // pred_fallthru
      _
    // Predicated region
    $region10: #{tpu_custom_call.1} parent=1 // pred_check
      _
    $region11: #{tpu_custom_call.1} parent=1 // pred_check_branch
      %28 = sbr.rel (0) target = $region13
    $region12: #{tpu_custom_call.1} parent=1 // pred_region
      _
    $region13: #{tpu_custom_call.1} parent=1 // pred_fallthru
      _
    // Predicated region
    $region14: #{tpu_custom_call.1} parent=1 // pred_check
      _
    $region15: #{tpu_custom_call.1} parent=1 // pred_check_branch
      %30 = sbr.rel (0) target = $region17
    $region16: #{tpu_custom_call.1} parent=1 // pred_region
      _
    $region17: #{tpu_custom_call.1} parent=1 // pred_fallthru
      _
    // Predicated region
    $region18: #{tpu_custom_call.1} parent=1 // pred_check
      _
    $region19: #{tpu_custom_call.1} parent=1 // pred_check_branch
      %32 = sbr.rel (0) target = $region21
    $region20: #{tpu_custom_call.1} parent=1 // pred_region
      _
    $region21: #{tpu_custom_call.1} parent=1 // pred_fallthru
      _
    // Predicated region
    $region22: #{tpu_custom_call.1} parent=1 // pred_check
      _
    $region23: #{tpu_custom_call.1} parent=1 // pred_check_branch
      %34 = sbr.rel (0) target = $region25
    $region24: #{tpu_custom_call.1} parent=1 // pred_region
      %36 = dma.done [#allocation3], 2048
    $region25: #{tpu_custom_call.1} parent=1 // pred_fallthru
      _
    %v37 = vld [vmem:[#allocation2] sm:$0xff]
    %v38 = vld [vmem:[#allocation2 + $0x8] sm:$0xff]
    %v39 = vld [vmem:[#allocation2 + $0x10] sm:$0xff]
    %v40 = vld [vmem:[#allocation2 + $0x18] sm:$0xff]
    %v41 = vld [vmem:[#allocation2 + $0x20] sm:$0xff]
    %v42 = vld [vmem:[#allocation2 + $0x28] sm:$0xff]
    %v43 = vld [vmem:[#allocation2 + $0x30] sm:$0xff]
    %v44 = vld [vmem:[#allocation2 + $0x38] sm:$0xff]
    %v45 = vld [vmem:[#allocation2 + $0x40] sm:$0xff]
    %v46 = vld [vmem:[#allocation2 + $0x48] sm:$0xff]
    %v47 = vld [vmem:[#allocation2 + $0x50] sm:$0xff]
    %v48 = vld [vmem:[#allocation2 + $0x58] sm:$0xff]
    %v49 = vld [vmem:[#allocation2 + $0x60] sm:$0xff]
    %v50 = vld [vmem:[#allocation2 + $0x68] sm:$0xff]
    %v51 = vld [vmem:[#allocation2 + $0x70] sm:$0xff]
    %v52 = vld [vmem:[#allocation2 + $0x78] sm:$0xff]
    %v53 = vadd.f32 %v37, %v38
    %54 = vadd.xlane.f32.xlu0 %v53
    %v55 = vpop.xlane.xlu0 %54
    %v56 = vadd.f32 %v39, %v40
    %57 = vadd.xlane.f32.xlu0 %v56
    %v58 = vpop.xlane.xlu0 %57
    %v59 = vadd.f32 %v41, %v42
    %60 = vadd.xlane.f32.xlu0 %v59
    %v61 = vpop.xlane.xlu0 %60
    %v62 = vadd.f32 %v43, %v44
    %63 = vadd.xlane.f32.xlu0 %v62
    %v64 = vpop.xlane.xlu0 %63
    %v65 = vadd.f32 %v45, %v46
    %66 = vadd.xlane.f32.xlu0 %v65
    %v67 = vpop.xlane.xlu0 %66
    %v68 = vadd.f32 %v47, %v48
    %69 = vadd.xlane.f32.xlu0 %v68
    %v70 = vpop.xlane.xlu0 %69
    %v71 = vadd.f32 %v49, %v50
    %72 = vadd.xlane.f32.xlu0 %v71
    %v73 = vpop.xlane.xlu0 %72
    %v74 = vadd.f32 %v51, %v52
    %75 = vadd.xlane.f32.xlu0 %v74
    %v76 = vpop.xlane.xlu0 %75
    %v77 = vmul.f32 %v55, 0.00390625
    %v78 = vmul.f32 %v58, 0.00390625
    %v79 = vmul.f32 %v61, 0.00390625
    %v80 = vmul.f32 %v64, 0.00390625
    %v81 = vmul.f32 %v67, 0.00390625
    %v82 = vmul.f32 %v70, 0.00390625
    %v83 = vmul.f32 %v73, 0.00390625
    %v84 = vmul.f32 %v76, 0.00390625
    %v85 = vld [vmem:[%s1] sm:$0xff]
    %v86 = vld [vmem:[%s1 + $0x8] sm:$0xff]
    %v87 = vld [vmem:[%s1 + $0x10] sm:$0xff]
    %v88 = vld [vmem:[%s1 + $0x18] sm:$0xff]
    %v89 = vld [vmem:[%s2] sm:$0x1]
    %v91 = vperm.slane %v89, 0
    %v101 = vlaneseq
    %v102 = vand.u32 %v101, 127
    %v103 = vperm.slane %v77, %v102
    %v104 = vadd.s32 %v102, 4294967288
    %v105 = vperm.slane %v78, %v104
    %vm106 = vcmask 130112
    %v107 = vsel %vm106, %v105, %v103
    %v108 = vadd.s32 %v102, 4294967280
    %v109 = vperm.slane %v79, %v108
    %vm110 = vcmask 195712
    %v111 = vsel %vm110, %v109, %v107
    %v112 = vadd.s32 %v102, 4294967272
    %v113 = vperm.slane %v80, %v112
    %vm114 = vcmask 261312
    %v115 = vsel %vm114, %v113, %v111
    %v116 = vperm.slane %v81, %v102
    %v117 = vperm.slane %v82, %v104
    %v118 = vsel %vm106, %v117, %v116
    %v119 = vperm.slane %v83, %v108
    %v120 = vsel %vm110, %v119, %v118
    %v121 = vperm.slane %v84, %v112
    %v122 = vsel %vm114, %v121, %v120
    %vm123 = vcmask 1041409
    %v124 = vsel %vm123, %v122, %v115
    %vm125 = vcmask 261120
    %v126 = vsel %vm125, %v124, 0
    %128 = vmatpush.msra.mxu0 0.0
    %129 = vmatpush.msra.mxu0 0.0
    %130 = vmatpush.msra.mxu0 0.0
    %131 = vmatpush.msra.mxu0 0.0
    %132 = vmatpush.msra.mxu0 0.0
    %133 = vmatpush.msra.mxu0 0.0
    %134 = vmatpush.msra.mxu0 0.0
    %135 = vmatpush.msra.mxu0 0.0
    %136 = vmatpush.msra.mxu0 0.0
    %137 = vmatpush.msra.mxu0 0.0
    %138 = vmatpush.msra.mxu0 0.0
    %139 = vmatpush.msra.mxu0 0.0
    %140 = vmatpush.msra.mxu0 %v88
    %141 = vmatpush.msra.mxu0 %v87
    %142 = vmatpush.msra.mxu0 %v86
    %143 = vmatpush.msra.mxu0 %v85
    %144 = vmatmul.f32.gmra.mxu0 %v126
    %v145 = vpop.f32.mrf.mxu0
    %v146 = vadd.f32 %v91, %v145
    %147 = vdwg.mxu0
    %v148 = vmax.f32 %v146, 0.0
    %v149 = vld [vmem:[%s3] sm:$0xff]
    %v150 = vld [vmem:[%s4] sm:$0x1]
    %v152 = vperm.slane %v150, 0
    %vm154 = vcmask 64512
    %v156 = vsel %vm154, %v148, 0
    %158 = vmatpush.msra.mxu0 0.0
    %159 = vmatpush.msra.mxu0 0.0
    %160 = vmatpush.msra.mxu0 0.0
    %161 = vmatpush.msra.mxu0 0.0
    %162 = vmatpush.msra.mxu0 0.0
    %163 = vmatpush.msra.mxu0 0.0
    %164 = vmatpush.msra.mxu0 0.0
    %165 = vmatpush.msra.mxu0 0.0
    %166 = vmatpush.msra.mxu0 0.0
    %167 = vmatpush.msra.mxu0 0.0
    %168 = vmatpush.msra.mxu0 0.0
    %169 = vmatpush.msra.mxu0 0.0
    %170 = vmatpush.msra.mxu0 0.0
    %171 = vmatpush.msra.mxu0 0.0
    %172 = vmatpush.msra.mxu0 0.0
    %173 = vmatpush.msra.mxu0 %v149
    %174 = vmatmul.f32.gmra.mxu0 %v156
    %v175 = vpop.f32.mrf.mxu0
    %v176 = vadd.f32 %v152, %v175
    %177 = vdwg.mxu0
    %v178 = vxor.u32 %v176, 2147483648
    %v179 = vmul.f32 %v178, 1.442695
    %v180 = vpow.pop %v179
    %v181 = vadd.f32 %v180, 1.0
    %v182 = vrcp.pop %v181
    %v183 = vmul.f32 %v181, %v182
    %v184 = vsub.f32 1.0, %v183
    %v185 = vmul.f32 %v182, %v184
    %v186 = vadd.f32 %v182, %v185
    %vm187 = vweird.f32 %v181
    %vm188 = vweird.f32 %v182
    %vm189 = vmor %vm187, %vm188
    %v190 = vsel %vm189, %v182, %v186
    %v191 = vand.u32 2147483647, %v181
    %vm192 = vcmp.eq.f32.partialorder %v191, 8.507059e+37
    %v193 = vand.u32 %v181, 2147483648
    %v194 = vor.u32 1.1754944e-38, %v193
    %v195 = vsel %vm192, %v194, %v190
    %v196 = vmul.f32 1.0, %v195
    %v197 = vperm.slane %v196, 0
    %v198 = vlaneseq
    %v199 = vshrl.u32 %v198, 7
    %201 = vset.pattern.permute.xlu0 %v199
    %202 = vperm.xlu0 %201, %v197
    %v203 = vpop.permute.xlu0 %202
    %v204 = vlaneseq
    %v205 = vshrl.u32 %v204, 7
    %v206 = vadd.s32 %v205, 8
    %207 = vset.pattern.permute.xlu0 %v206
    %208 = vperm.xlu0 %207, %v197
    %v209 = vpop.permute.xlu0 %208
    %v210 = vlaneseq
    %v211 = vshrl.u32 %v210, 7
    %v212 = vadd.s32 %v211, 16
    %213 = vset.pattern.permute.xlu0 %v212
    %214 = vperm.xlu0 %213, %v197
    %v215 = vpop.permute.xlu0 %214
    %v216 = vlaneseq
    %v217 = vshrl.u32 %v216, 7
    %v218 = vadd.s32 %v217, 24
    %219 = vset.pattern.permute.xlu0 %v218
    %220 = vperm.xlu0 %219, %v197
    %v221 = vpop.permute.xlu0 %220
    %v222 = vperm.slane %v196, 1
    %v223 = vlaneseq
    %v224 = vshrl.u32 %v223, 7
    %226 = vset.pattern.permute.xlu0 %v224
    %227 = vperm.xlu0 %226, %v222
    %v228 = vpop.permute.xlu0 %227
    %v229 = vlaneseq
    %v230 = vshrl.u32 %v229, 7
    %v231 = vadd.s32 %v230, 8
    %232 = vset.pattern.permute.xlu0 %v231
    %233 = vperm.xlu0 %232, %v222
    %v234 = vpop.permute.xlu0 %233
    %v235 = vlaneseq
    %v236 = vshrl.u32 %v235, 7
    %v237 = vadd.s32 %v236, 16
    %238 = vset.pattern.permute.xlu0 %v237
    %239 = vperm.xlu0 %238, %v222
    %v240 = vpop.permute.xlu0 %239
    %v241 = vlaneseq
    %v242 = vshrl.u32 %v241, 7
    %v243 = vadd.s32 %v242, 24
    %244 = vset.pattern.permute.xlu0 %v243
    %245 = vperm.xlu0 %244, %v222
    %v246 = vpop.permute.xlu0 %245
    %v247 = vmul.f32 %v37, %v203
    %v248 = vmul.f32 %v38, %v203
    %v249 = vmul.f32 %v39, %v209
    %v250 = vmul.f32 %v40, %v209
    %v251 = vmul.f32 %v41, %v215
    %v252 = vmul.f32 %v42, %v215
    %v253 = vmul.f32 %v43, %v221
    %v254 = vmul.f32 %v44, %v221
    %v255 = vmul.f32 %v45, %v228
    %v256 = vmul.f32 %v46, %v228
    %v257 = vmul.f32 %v47, %v234
    %v258 = vmul.f32 %v48, %v234
    %v259 = vmul.f32 %v49, %v240
    %v260 = vmul.f32 %v50, %v240
    %v261 = vmul.f32 %v51, %v246
    %v262 = vmul.f32 %v52, %v246
    %263 = vst [vmem:[#allocation5] sm:$0xff] %v247
    %264 = vst [vmem:[#allocation5 + $0x8] sm:$0xff] %v248
    %265 = vst [vmem:[#allocation5 + $0x10] sm:$0xff] %v249
    %266 = vst [vmem:[#allocation5 + $0x18] sm:$0xff] %v250
    %267 = vst [vmem:[#allocation5 + $0x20] sm:$0xff] %v251
    %268 = vst [vmem:[#allocation5 + $0x28] sm:$0xff] %v252
    %269 = vst [vmem:[#allocation5 + $0x30] sm:$0xff] %v253
    %270 = vst [vmem:[#allocation5 + $0x38] sm:$0xff] %v254
    %271 = vst [vmem:[#allocation5 + $0x40] sm:$0xff] %v255
    %272 = vst [vmem:[#allocation5 + $0x48] sm:$0xff] %v256
    %273 = vst [vmem:[#allocation5 + $0x50] sm:$0xff] %v257
    %274 = vst [vmem:[#allocation5 + $0x58] sm:$0xff] %v258
    %275 = vst [vmem:[#allocation5 + $0x60] sm:$0xff] %v259
    %276 = vst [vmem:[#allocation5 + $0x68] sm:$0xff] %v260
    %277 = vst [vmem:[#allocation5 + $0x70] sm:$0xff] %v261
    %278 = vst [vmem:[#allocation5 + $0x78] sm:$0xff] %v262
    // Predicated region
    $region26: #{tpu_custom_call.1} parent=1 // pred_check
      _
    $region27: #{tpu_custom_call.1} parent=1 // pred_check_branch
      %280 = sbr.rel (0) target = $region29
    $region28: #{tpu_custom_call.1} parent=1 // pred_region
      %282 = vsyncadd [#allocation4], 0
      %s283 = sshll.u32 [#allocation5], 4
      %s284 = int_to_ptr.vmem [resolvable:$true] %s283
      %s285 = sshll.u32 %s5, 4
      %s286 = int_to_ptr.hbm [resolvable:$true] %s285
      %291 = dma.vmem_to_hbm [thread:$0]  %s284, 2048, %s286, [#allocation4], 256, 256, 16
    $region29: #{tpu_custom_call.1} parent=1 // pred_fallthru
      _
    // Predicated region
    $region30: #{tpu_custom_call.1} parent=1 // pred_check
      _
    $region31: #{tpu_custom_call.1} parent=1 // pred_check_branch
      %293 = sbr.rel (0) target = $region33
    $region32: #{tpu_custom_call.1} parent=1 // pred_region
      %295 = dma.done [#allocation4], 2048
    $region33: #{tpu_custom_call.1} parent=1 // pred_fallthru
      _
    %296 = vsyncpa [#allocation3], 1
    %297 = vsyncpa [#allocation4], 1

</llo_original>
